<compile_context>
chip_gen: v5e
topology: v5e:2x2
jax: 0.10.0
libtpu: 0.0.40
codegen_flags: <defaults>
</compile_context>

<pallas_src>
import math
from functools import partial

import jax
import jax.numpy as jnp
from jax.experimental import pallas as pl
from jax.experimental.pallas import tpu as pltpu

EPS = 1e-5
LANE = 128


# ----------------------------- Pallas kernel ------------------------------

def _bn_train(v, gamma, beta):
    """Training-mode BatchNorm1d (biased variance), f32."""
    mean = jnp.mean(v, axis=0, keepdims=True)
    var = jnp.mean((v - mean) ** 2, axis=0, keepdims=True)
    return (v - mean) * jax.lax.rsqrt(var + EPS) * gamma + beta


def _resgcn_kernel(x_ref, gf_ref, bf_ref, wf_ref,
                   gc_ref, bc_ref, wc_ref, bias_ref,
                   a_ref, p_ref,
                   gl_ref, bl_ref, wl_ref, bfc_ref,
                   gh_ref, bh_ref,
                   local_ref, out_ref,
                   *, num_conv, num_fc, residual):
    # bn_feat -> conv_feat (gfn=True: x@W only, no bias, no propagation) -> ReLU
    xn = _bn_train(x_ref[...], gf_ref[...], bf_ref[...])
    h = jnp.maximum(
        jnp.dot(xn, wf_ref[...], preferred_element_type=jnp.float32), 0.0)

    a = a_ref[...]

    def conv_layer(l, h):
        hn = _bn_train(h, gc_ref[l], bc_ref[l])
        t = jnp.dot(hn, wc_ref[l], preferred_element_type=jnp.float32)      # h @ W
        t = jnp.dot(a, t, preferred_element_type=jnp.float32) + bias_ref[l]  # propagate + bias
        t = jnp.maximum(t, 0.0)
        return h + t if residual else t

    h = jax.lax.fori_loop(0, num_conv, conv_layer, h, unroll=True)

    local_ref[...] = h

    # global_add_pool fused while h is still resident in VMEM.
    xg = jnp.dot(p_ref[...], h, preferred_element_type=jnp.float32)

    def fc_layer(l, v):
        vn = _bn_train(v, gl_ref[l], bl_ref[l])
        t = jnp.dot(vn, wl_ref[l], preferred_element_type=jnp.float32) + bfc_ref[l]
        return jnp.maximum(t, 0.0)

    xg = jax.lax.fori_loop(0, num_fc, fc_layer, xg, unroll=True)
    out_ref[...] = _bn_train(xg, gh_ref[...], bh_ref[...])


def _vmem_limit_bytes(args, out_shapes):
    total = sum(int(a.size) * a.dtype.itemsize for a in args)
    total += sum(math.prod(s.shape) * jnp.dtype(s.dtype).itemsize
                 for s in jax.tree_util.tree_leaves(out_shapes))
    # 2x headroom for in-kernel temporaries; clamp to a budget safe on v5e/v6e/v7x.
    return int(min(48 << 20, max(16 << 20, 2 * total + (2 << 20))))


def resgcn_fused(x, gf, bf, wf, gc, bc, wc, bias, a_prop, pool_mat,
                 gl, bl, wl, bfc, gh, bh, *, num_conv, num_fc, residual):
    n, hp = x.shape[0], wf.shape[1]
    g = pool_mat.shape[0]
    out_shape = (jax.ShapeDtypeStruct((n, hp), jnp.float32),   # local_rep (padded)
                 jax.ShapeDtypeStruct((g, hp), jnp.float32))   # head output (padded)
    args = (x, gf, bf, wf, gc, bc, wc, bias, a_prop, pool_mat,
            gl, bl, wl, bfc, gh, bh)
    return pl.pallas_call(
        partial(_resgcn_kernel, num_conv=num_conv, num_fc=num_fc, residual=residual),
        out_shape=out_shape,
        compiler_params=pltpu.CompilerParams(
            vmem_limit_bytes=_vmem_limit_bytes(args, out_shape)),
    )(*args)


# ------------------------------ glue (JAX) --------------------------------

def build_prop_matrix(edge_index, num_nodes):
    """Dense propagation matrix: propagate(x) == A_prop @ x (aggregate at edge_index[1])."""
    row, col = edge_index[0], edge_index[1]
    w = jnp.where(row != col, 1.0, 0.0).astype(jnp.float32)      # remove self loops
    A = jnp.zeros((num_nodes, num_nodes), jnp.float32).at[row, col].add(w)
    A = A + jnp.eye(num_nodes, dtype=jnp.float32)                # add self loops (weight 1)
    deg = jnp.sum(A, axis=1)                                     # scatter_add over row
    d = jnp.where(deg > 0, 1.0 / jnp.sqrt(deg), 0.0)
    A_hat = d[:, None] * A * d[None, :]                          # norm = d[row]*w*d[col]
    return A_hat.T


def build_pool_matrix(batch, num_graphs):
    return (batch[None, :] == jnp.arange(num_graphs)[:, None]).astype(jnp.float32)


def _round_up(n, m=LANE):
    return ((n + m - 1) // m) * m


def _pad_last(a, size):
    pad = size - a.shape[-1]
    if pad <= 0:
        return a
    widths = [(0, 0)] * (a.ndim - 1) + [(0, pad)]
    return jnp.pad(a, widths)


def _pad2(a, rows, cols):
    return jnp.pad(a, ((0, rows - a.shape[0]), (0, cols - a.shape[1])))


def glorot(key, fan_in, fan_out):
    s = jnp.sqrt(6.0 / (fan_in + fan_out))
    return jax.random.uniform(key, (fan_in, fan_out), jnp.float32, -s, s)


def init_params(key, feat_dim, hidden_dim, num_conv_layers, num_fc_layers):
    keys = jax.random.split(key, 4 + num_conv_layers + num_fc_layers)
    params = {}
    params["bn_feat"] = (jnp.ones((1, feat_dim), jnp.float32),
                         jnp.full((1, feat_dim), 1e-4, jnp.float32))
    params["conv_feat_w"] = glorot(keys[0], feat_dim, hidden_dim)   # gfn=True: no bias/prop
    convs = []
    for i in range(num_conv_layers):
        convs.append(dict(
            bn_gamma=jnp.ones((1, hidden_dim), jnp.float32),
            bn_beta=jnp.full((1, hidden_dim), 1e-4, jnp.float32),
            w=glorot(keys[1 + i], hidden_dim, hidden_dim),
            b=jnp.zeros((1, hidden_dim), jnp.float32),              # zeros() init
        ))
    params["convs"] = convs
    fcs = []
    bound = 1.0 / jnp.sqrt(hidden_dim)
    for i in range(num_fc_layers - 1):
        kw, kb = jax.random.split(keys[1 + num_conv_layers + i])
        fcs.append(dict(
            bn_gamma=jnp.ones((1, hidden_dim), jnp.float32),
            bn_beta=jnp.full((1, hidden_dim), 1e-4, jnp.float32),
            w=jax.random.uniform(kw, (hidden_dim, hidden_dim), jnp.float32, -bound, bound),
            b=jax.random.uniform(kb, (1, hidden_dim), jnp.float32, -bound, bound),
        ))
    params["fcs"] = fcs
    params["bn_hidden"] = (jnp.ones((1, hidden_dim), jnp.float32),
                           jnp.full((1, hidden_dim), 1e-4, jnp.float32))
    return params


def resgcn_forward(params, x, edge_index, batch, num_graphs, conv_residual=False):
    """Matches ResGCN.forward with pool='sum', bn=True, gfn=False, collapse=False,
    residual=conv_residual, dropout=0, edge_norm=True, use_xg=False."""
    n, feat_dim = x.shape
    hidden_dim = params["conv_feat_w"].shape[1]
    fp, hp = _round_up(feat_dim), _round_up(hidden_dim)

    a_prop = build_prop_matrix(edge_index, n)
    pool_mat = build_pool_matrix(batch, num_graphs)

    # Pad channel dims to 128 lanes (zero columns are inert through the whole network);
    # the node dim is never padded so BN batch statistics are exact.
    gf, bf = (_pad_last(t, fp) for t in params["bn_feat"])
    wf = _pad2(params["conv_feat_w"], fp, hp)
    x_p = _pad_last(x, fp)

    convs = params["convs"]
    gc = jnp.stack([_pad_last(l["bn_gamma"], hp) for l in convs])   # [L,1,Hp]
    bc = jnp.stack([_pad_last(l["bn_beta"], hp) for l in convs])
    wc = jnp.stack([_pad2(l["w"], hp, hp) for l in convs])          # [L,Hp,Hp]
    bias = jnp.stack([_pad_last(l["b"], hp) for l in convs])

    fcs = params["fcs"]
    if fcs:
        gl = jnp.stack([_pad_last(l["bn_gamma"], hp) for l in fcs])
        bl = jnp.stack([_pad_last(l["bn_beta"], hp) for l in fcs])
        wl = jnp.stack([_pad2(l["w"], hp, hp) for l in fcs])
        bfc = jnp.stack([_pad_last(l["b"], hp) for l in fcs])
        num_fc = len(fcs)
    else:  # no FC layers: inert dummies, fori_loop(0, 0) skips them
        gl = bl = bfc = jnp.zeros((1, 1, hp), jnp.float32)
        wl = jnp.zeros((1, hp, hp), jnp.float32)
        num_fc = 0

    gh, bh = (_pad_last(t, hp) for t in params["bn_hidden"])

    local_p, out_p = resgcn_fused(
        x_p, gf, bf, wf, gc, bc, wc, bias, a_prop, pool_mat,
        gl, bl, wl, bfc, gh, bh,
        num_conv=len(convs), num_fc=num_fc, residual=conv_residual)

    return out_p[:, :hidden_dim], local_p[:, :hidden_dim]


# --------------------------- pure-JAX reference ----------------------------

def reference_forward(params, x, edge_index, batch, num_graphs, conv_residual=False):
    dot = partial(jnp.dot, precision=jax.lax.Precision.HIGHEST)
    a_prop = build_prop_matrix(edge_index, x.shape[0])
    pool_mat = build_pool_matrix(batch, num_graphs)

    def bn(v, gamma, beta):
        mean = jnp.mean(v, axis=0, keepdims=True)
        var = jnp.mean((v - mean) ** 2, axis=0, keepdims=True)
        return (v - mean) / jnp.sqrt(var + EPS) * gamma + beta

    g0, b0 = params["bn_feat"]
    h = jax.nn.relu(dot(bn(x, g0, b0), params["conv_feat_w"]))
    for l in params["convs"]:
        t = dot(bn(h, l["bn_gamma"], l["bn_beta"]), l["w"])
        t = jax.nn.relu(dot(a_prop, t) + l["b"])
        h = h + t if conv_residual else t
    local = h
    xg = dot(pool_mat, h)
    for l in params["fcs"]:
        xg = jax.nn.relu(dot(bn(xg, l["bn_gamma"], l["bn_beta"]), l["w"]) + l["b"])
    gh, bh = params["bn_hidden"]
    return bn(xg, gh, bh), local


# --------------------------------- main ------------------------------------

if __name__ == "__main__":
    key = jax.random.PRNGKey(0)
    N, feat_dim, hidden_dim = 24, 16, 32
    num_conv_layers, num_fc_layers = 3, 2
    num_graphs = 3
    E = 48

    kx, ks, kd, kp = jax.random.split(key, 4)
    x = jax.random.normal(kx, (N, feat_dim), jnp.float32)
    src = jax.random.randint(ks, (E,), 0, N, jnp.int32)
    dst = jax.random.randint(kd, (E,), 0, N, jnp.int32)
    edge_index = jnp.stack([src, dst])
    batch = jnp.repeat(jnp.arange(num_graphs, dtype=jnp.int32), N // num_graphs)

    params = init_params(kp, feat_dim, hidden_dim, num_conv_layers, num_fc_layers)

    out, local_rep = resgcn_forward(params, x, edge_index, batch, num_graphs)
    jax.block_until_ready((out, local_rep))

    assert out.shape == (num_graphs, hidden_dim)
    assert local_rep.shape == (N, hidden_dim)
    assert bool(jnp.all(jnp.isfinite(out))) and bool(jnp.all(jnp.isfinite(local_rep)))

    ref_out, ref_local = reference_forward(params, x, edge_index, batch, num_graphs)
    assert bool(jnp.allclose(local_rep, ref_local, rtol=5e-3, atol=5e-3)), "local_rep mismatch"
    assert bool(jnp.allclose(out, ref_out, rtol=5e-3, atol=5e-3)), "output mismatch"

    print("KERNEL_OK")
</pallas_src>

<mosaic_0001>
module attributes {stable_mosaic.version = 11 : i64} {
  func.func @_resgcn_kernel(%arg0: memref<24x128xf32, #tpu.memory_space<vmem>>, %arg1: memref<1x128xf32, #tpu.memory_space<vmem>>, %arg2: memref<1x128xf32, #tpu.memory_space<vmem>>, %arg3: memref<128x128xf32, #tpu.memory_space<vmem>>, %arg4: memref<3x1x128xf32, #tpu.memory_space<vmem>>, %arg5: memref<3x1x128xf32, #tpu.memory_space<vmem>>, %arg6: memref<3x128x128xf32, #tpu.memory_space<vmem>>, %arg7: memref<3x1x128xf32, #tpu.memory_space<vmem>>, %arg8: memref<24x24xf32, #tpu.memory_space<vmem>>, %arg9: memref<3x24xf32, #tpu.memory_space<vmem>>, %arg10: memref<1x1x128xf32, #tpu.memory_space<vmem>>, %arg11: memref<1x1x128xf32, #tpu.memory_space<vmem>>, %arg12: memref<1x128x128xf32, #tpu.memory_space<vmem>>, %arg13: memref<1x1x128xf32, #tpu.memory_space<vmem>>, %arg14: memref<1x128xf32, #tpu.memory_space<vmem>>, %arg15: memref<1x128xf32, #tpu.memory_space<vmem>>, %arg16: memref<24x128xf32, #tpu.memory_space<vmem>>, %arg17: memref<3x128xf32, #tpu.memory_space<vmem>>) attributes {dimension_semantics = [], scalar_prefetch = 0 : i64, scratch_operands = 0 : i64, tpu.core_type = #tpu.core_type<tc>} {
    %c0 = arith.constant 0 : index
    %c0_0 = arith.constant 0 : index
    %0 = vector.load %arg0[%c0, %c0_0] : memref<24x128xf32, #tpu.memory_space<vmem>>, vector<24x128xf32>
    %c0_1 = arith.constant 0 : index
    %c0_2 = arith.constant 0 : index
    %1 = vector.load %arg1[%c0_1, %c0_2] : memref<1x128xf32, #tpu.memory_space<vmem>>, vector<1x128xf32>
    %c0_3 = arith.constant 0 : index
    %c0_4 = arith.constant 0 : index
    %2 = vector.load %arg2[%c0_3, %c0_4] : memref<1x128xf32, #tpu.memory_space<vmem>>, vector<1x128xf32>
    %cst = arith.constant dense<0.000000e+00> : vector<128xf32>
    %3 = vector.multi_reduction <add>, %0, %cst [0] : vector<24x128xf32> to vector<128xf32>
    %4 = vector.shape_cast %3 : vector<128xf32> to vector<1x128xf32>
    %cst_5 = arith.constant 2.400000e+01 : f32
    %5 = vector.broadcast %cst_5 : f32 to vector<1x128xf32>
    %6 = arith.divf %4, %5 : vector<1x128xf32>
    %7 = vector.broadcast %6 : vector<1x128xf32> to vector<24x128xf32>
    %8 = arith.subf %0, %7 : vector<24x128xf32>
    %9 = arith.mulf %8, %8 : vector<24x128xf32>
    %cst_6 = arith.constant dense<0.000000e+00> : vector<128xf32>
    %10 = vector.multi_reduction <add>, %9, %cst_6 [0] : vector<24x128xf32> to vector<128xf32>
    %11 = vector.shape_cast %10 : vector<128xf32> to vector<1x128xf32>
    %cst_7 = arith.constant 2.400000e+01 : f32
    %12 = vector.broadcast %cst_7 : f32 to vector<1x128xf32>
    %13 = arith.divf %11, %12 : vector<1x128xf32>
    %14 = vector.broadcast %6 : vector<1x128xf32> to vector<24x128xf32>
    %15 = arith.subf %0, %14 : vector<24x128xf32>
    %cst_8 = arith.constant 9.99999974E-6 : f32
    %16 = vector.broadcast %cst_8 : f32 to vector<1x128xf32>
    %17 = arith.addf %13, %16 : vector<1x128xf32>
    %18 = math.rsqrt %17 : vector<1x128xf32>
    %19 = vector.broadcast %18 : vector<1x128xf32> to vector<24x128xf32>
    %20 = arith.mulf %15, %19 : vector<24x128xf32>
    %21 = vector.broadcast %1 : vector<1x128xf32> to vector<24x128xf32>
    %22 = arith.mulf %20, %21 : vector<24x128xf32>
    %23 = vector.broadcast %2 : vector<1x128xf32> to vector<24x128xf32>
    %24 = arith.addf %22, %23 : vector<24x128xf32>
    %c0_9 = arith.constant 0 : index
    %c0_10 = arith.constant 0 : index
    %25 = vector.load %arg3[%c0_9, %c0_10] : memref<128x128xf32, #tpu.memory_space<vmem>>, vector<128x128xf32>
    %cst_11 = arith.constant dense<0.000000e+00> : vector<24x128xf32>
    %26 = tpu.matmul %24, %25, %cst_11 {dimension_numbers = #tpu.dot_dimension_numbers<[1], [0], [0], [1], [0, 0, 1, 1], [], []>} : vector<24x128xf32>, vector<128x128xf32>, vector<24x128xf32> -> vector<24x128xf32>
    %cst_12 = arith.constant 0.000000e+00 : f32
    %27 = vector.broadcast %cst_12 : f32 to vector<24x128xf32>
    %28 = arith.maximumf %26, %27 : vector<24x128xf32>
    %c0_13 = arith.constant 0 : index
    %c0_14 = arith.constant 0 : index
    %29 = vector.load %arg8[%c0_13, %c0_14] : memref<24x24xf32, #tpu.memory_space<vmem>>, vector<24x24xf32>
    %c0_i32 = arith.constant 0 : i32
    %30 = arith.index_cast %c0_i32 : i32 to index
    %c0_15 = arith.constant 0 : index
    %c0_16 = arith.constant 0 : index
    %31 = vector.load %arg4[%30, %c0_15, %c0_16] : memref<3x1x128xf32, #tpu.memory_space<vmem>>, vector<1x1x128xf32>
    %32 = vector.shape_cast %31 : vector<1x1x128xf32> to vector<1x128xf32>
    %33 = arith.index_cast %c0_i32 : i32 to index
    %c0_17 = arith.constant 0 : index
    %c0_18 = arith.constant 0 : index
    %34 = vector.load %arg5[%33, %c0_17, %c0_18] : memref<3x1x128xf32, #tpu.memory_space<vmem>>, vector<1x1x128xf32>
    %35 = vector.shape_cast %34 : vector<1x1x128xf32> to vector<1x128xf32>
    %cst_19 = arith.constant dense<0.000000e+00> : vector<128xf32>
    %36 = vector.multi_reduction <add>, %28, %cst_19 [0] : vector<24x128xf32> to vector<128xf32>
    %37 = vector.shape_cast %36 : vector<128xf32> to vector<1x128xf32>
    %cst_20 = arith.constant 2.400000e+01 : f32
    %38 = vector.broadcast %cst_20 : f32 to vector<1x128xf32>
    %39 = arith.divf %37, %38 : vector<1x128xf32>
    %40 = vector.broadcast %39 : vector<1x128xf32> to vector<24x128xf32>
    %41 = arith.subf %28, %40 : vector<24x128xf32>
    %42 = arith.mulf %41, %41 : vector<24x128xf32>
    %cst_21 = arith.constant dense<0.000000e+00> : vector<128xf32>
    %43 = vector.multi_reduction <add>, %42, %cst_21 [0] : vector<24x128xf32> to vector<128xf32>
    %44 = vector.shape_cast %43 : vector<128xf32> to vector<1x128xf32>
    %cst_22 = arith.constant 2.400000e+01 : f32
    %45 = vector.broadcast %cst_22 : f32 to vector<1x128xf32>
    %46 = arith.divf %44, %45 : vector<1x128xf32>
    %47 = vector.broadcast %39 : vector<1x128xf32> to vector<24x128xf32>
    %48 = arith.subf %28, %47 : vector<24x128xf32>
    %cst_23 = arith.constant 9.99999974E-6 : f32
    %49 = vector.broadcast %cst_23 : f32 to vector<1x128xf32>
    %50 = arith.addf %46, %49 : vector<1x128xf32>
    %51 = math.rsqrt %50 : vector<1x128xf32>
    %52 = vector.broadcast %51 : vector<1x128xf32> to vector<24x128xf32>
    %53 = arith.mulf %48, %52 : vector<24x128xf32>
    %54 = vector.broadcast %32 : vector<1x128xf32> to vector<24x128xf32>
    %55 = arith.mulf %53, %54 : vector<24x128xf32>
    %56 = vector.broadcast %35 : vector<1x128xf32> to vector<24x128xf32>
    %57 = arith.addf %55, %56 : vector<24x128xf32>
    %58 = arith.index_cast %c0_i32 : i32 to index
    %c0_24 = arith.constant 0 : index
    %c0_25 = arith.constant 0 : index
    %59 = vector.load %arg6[%58, %c0_24, %c0_25] : memref<3x128x128xf32, #tpu.memory_space<vmem>>, vector<1x128x128xf32>
    %60 = vector.shape_cast %59 : vector<1x128x128xf32> to vector<128x128xf32>
    %cst_26 = arith.constant dense<0.000000e+00> : vector<24x128xf32>
    %61 = tpu.matmul %57, %60, %cst_26 {dimension_numbers = #tpu.dot_dimension_numbers<[1], [0], [0], [1], [0, 0, 1, 1], [], []>} : vector<24x128xf32>, vector<128x128xf32>, vector<24x128xf32> -> vector<24x128xf32>
    %cst_27 = arith.constant dense<0.000000e+00> : vector<24x128xf32>
    %62 = tpu.matmul %29, %61, %cst_27 {dimension_numbers = #tpu.dot_dimension_numbers<[1], [0], [0], [1], [0, 0, 1, 1], [], []>} : vector<24x24xf32>, vector<24x128xf32>, vector<24x128xf32> -> vector<24x128xf32>
    %63 = arith.index_cast %c0_i32 : i32 to index
    %c0_28 = arith.constant 0 : index
    %c0_29 = arith.constant 0 : index
    %64 = vector.load %arg7[%63, %c0_28, %c0_29] : memref<3x1x128xf32, #tpu.memory_space<vmem>>, vector<1x1x128xf32>
    %65 = vector.shape_cast %64 : vector<1x1x128xf32> to vector<1x128xf32>
    %66 = vector.broadcast %65 : vector<1x128xf32> to vector<24x128xf32>
    %67 = arith.addf %62, %66 : vector<24x128xf32>
    %cst_30 = arith.constant 0.000000e+00 : f32
    %68 = vector.broadcast %cst_30 : f32 to vector<24x128xf32>
    %69 = arith.maximumf %67, %68 : vector<24x128xf32>
    %c1_i32 = arith.constant 1 : i32
    %70 = arith.index_cast %c1_i32 : i32 to index
    %c0_31 = arith.constant 0 : index
    %c0_32 = arith.constant 0 : index
    %71 = vector.load %arg4[%70, %c0_31, %c0_32] : memref<3x1x128xf32, #tpu.memory_space<vmem>>, vector<1x1x128xf32>
    %72 = vector.shape_cast %71 : vector<1x1x128xf32> to vector<1x128xf32>
    %73 = arith.index_cast %c1_i32 : i32 to index
    %c0_33 = arith.constant 0 : index
    %c0_34 = arith.constant 0 : index
    %74 = vector.load %arg5[%73, %c0_33, %c0_34] : memref<3x1x128xf32, #tpu.memory_space<vmem>>, vector<1x1x128xf32>
    %75 = vector.shape_cast %74 : vector<1x1x128xf32> to vector<1x128xf32>
    %cst_35 = arith.constant dense<0.000000e+00> : vector<128xf32>
    %76 = vector.multi_reduction <add>, %69, %cst_35 [0] : vector<24x128xf32> to vector<128xf32>
    %77 = vector.shape_cast %76 : vector<128xf32> to vector<1x128xf32>
    %cst_36 = arith.constant 2.400000e+01 : f32
    %78 = vector.broadcast %cst_36 : f32 to vector<1x128xf32>
    %79 = arith.divf %77, %78 : vector<1x128xf32>
    %80 = vector.broadcast %79 : vector<1x128xf32> to vector<24x128xf32>
    %81 = arith.subf %69, %80 : vector<24x128xf32>
    %82 = arith.mulf %81, %81 : vector<24x128xf32>
    %cst_37 = arith.constant dense<0.000000e+00> : vector<128xf32>
    %83 = vector.multi_reduction <add>, %82, %cst_37 [0] : vector<24x128xf32> to vector<128xf32>
    %84 = vector.shape_cast %83 : vector<128xf32> to vector<1x128xf32>
    %cst_38 = arith.constant 2.400000e+01 : f32
    %85 = vector.broadcast %cst_38 : f32 to vector<1x128xf32>
    %86 = arith.divf %84, %85 : vector<1x128xf32>
    %87 = vector.broadcast %79 : vector<1x128xf32> to vector<24x128xf32>
    %88 = arith.subf %69, %87 : vector<24x128xf32>
    %cst_39 = arith.constant 9.99999974E-6 : f32
    %89 = vector.broadcast %cst_39 : f32 to vector<1x128xf32>
    %90 = arith.addf %86, %89 : vector<1x128xf32>
    %91 = math.rsqrt %90 : vector<1x128xf32>
    %92 = vector.broadcast %91 : vector<1x128xf32> to vector<24x128xf32>
    %93 = arith.mulf %88, %92 : vector<24x128xf32>
    %94 = vector.broadcast %72 : vector<1x128xf32> to vector<24x128xf32>
    %95 = arith.mulf %93, %94 : vector<24x128xf32>
    %96 = vector.broadcast %75 : vector<1x128xf32> to vector<24x128xf32>
    %97 = arith.addf %95, %96 : vector<24x128xf32>
    %98 = arith.index_cast %c1_i32 : i32 to index
    %c0_40 = arith.constant 0 : index
    %c0_41 = arith.constant 0 : index
    %99 = vector.load %arg6[%98, %c0_40, %c0_41] : memref<3x128x128xf32, #tpu.memory_space<vmem>>, vector<1x128x128xf32>
    %100 = vector.shape_cast %99 : vector<1x128x128xf32> to vector<128x128xf32>
    %cst_42 = arith.constant dense<0.000000e+00> : vector<24x128xf32>
    %101 = tpu.matmul %97, %100, %cst_42 {dimension_numbers = #tpu.dot_dimension_numbers<[1], [0], [0], [1], [0, 0, 1, 1], [], []>} : vector<24x128xf32>, vector<128x128xf32>, vector<24x128xf32> -> vector<24x128xf32>
    %cst_43 = arith.constant dense<0.000000e+00> : vector<24x128xf32>
    %102 = tpu.matmul %29, %101, %cst_43 {dimension_numbers = #tpu.dot_dimension_numbers<[1], [0], [0], [1], [0, 0, 1, 1], [], []>} : vector<24x24xf32>, vector<24x128xf32>, vector<24x128xf32> -> vector<24x128xf32>
    %103 = arith.index_cast %c1_i32 : i32 to index
    %c0_44 = arith.constant 0 : index
    %c0_45 = arith.constant 0 : index
    %104 = vector.load %arg7[%103, %c0_44, %c0_45] : memref<3x1x128xf32, #tpu.memory_space<vmem>>, vector<1x1x128xf32>
    %105 = vector.shape_cast %104 : vector<1x1x128xf32> to vector<1x128xf32>
    %106 = vector.broadcast %105 : vector<1x128xf32> to vector<24x128xf32>
    %107 = arith.addf %102, %106 : vector<24x128xf32>
    %cst_46 = arith.constant 0.000000e+00 : f32
    %108 = vector.broadcast %cst_46 : f32 to vector<24x128xf32>
    %109 = arith.maximumf %107, %108 : vector<24x128xf32>
    %c2_i32 = arith.constant 2 : i32
    %110 = arith.index_cast %c2_i32 : i32 to index
    %c0_47 = arith.constant 0 : index
    %c0_48 = arith.constant 0 : index
    %111 = vector.load %arg4[%110, %c0_47, %c0_48] : memref<3x1x128xf32, #tpu.memory_space<vmem>>, vector<1x1x128xf32>
    %112 = vector.shape_cast %111 : vector<1x1x128xf32> to vector<1x128xf32>
    %113 = arith.index_cast %c2_i32 : i32 to index
    %c0_49 = arith.constant 0 : index
    %c0_50 = arith.constant 0 : index
    %114 = vector.load %arg5[%113, %c0_49, %c0_50] : memref<3x1x128xf32, #tpu.memory_space<vmem>>, vector<1x1x128xf32>
    %115 = vector.shape_cast %114 : vector<1x1x128xf32> to vector<1x128xf32>
    %cst_51 = arith.constant dense<0.000000e+00> : vector<128xf32>
    %116 = vector.multi_reduction <add>, %109, %cst_51 [0] : vector<24x128xf32> to vector<128xf32>
    %117 = vector.shape_cast %116 : vector<128xf32> to vector<1x128xf32>
    %cst_52 = arith.constant 2.400000e+01 : f32
    %118 = vector.broadcast %cst_52 : f32 to vector<1x128xf32>
    %119 = arith.divf %117, %118 : vector<1x128xf32>
    %120 = vector.broadcast %119 : vector<1x128xf32> to vector<24x128xf32>
    %121 = arith.subf %109, %120 : vector<24x128xf32>
    %122 = arith.mulf %121, %121 : vector<24x128xf32>
    %cst_53 = arith.constant dense<0.000000e+00> : vector<128xf32>
    %123 = vector.multi_reduction <add>, %122, %cst_53 [0] : vector<24x128xf32> to vector<128xf32>
    %124 = vector.shape_cast %123 : vector<128xf32> to vector<1x128xf32>
    %cst_54 = arith.constant 2.400000e+01 : f32
    %125 = vector.broadcast %cst_54 : f32 to vector<1x128xf32>
    %126 = arith.divf %124, %125 : vector<1x128xf32>
    %127 = vector.broadcast %119 : vector<1x128xf32> to vector<24x128xf32>
    %128 = arith.subf %109, %127 : vector<24x128xf32>
    %cst_55 = arith.constant 9.99999974E-6 : f32
    %129 = vector.broadcast %cst_55 : f32 to vector<1x128xf32>
    %130 = arith.addf %126, %129 : vector<1x128xf32>
    %131 = math.rsqrt %130 : vector<1x128xf32>
    %132 = vector.broadcast %131 : vector<1x128xf32> to vector<24x128xf32>
    %133 = arith.mulf %128, %132 : vector<24x128xf32>
    %134 = vector.broadcast %112 : vector<1x128xf32> to vector<24x128xf32>
    %135 = arith.mulf %133, %134 : vector<24x128xf32>
    %136 = vector.broadcast %115 : vector<1x128xf32> to vector<24x128xf32>
    %137 = arith.addf %135, %136 : vector<24x128xf32>
    %138 = arith.index_cast %c2_i32 : i32 to index
    %c0_56 = arith.constant 0 : index
    %c0_57 = arith.constant 0 : index
    %139 = vector.load %arg6[%138, %c0_56, %c0_57] : memref<3x128x128xf32, #tpu.memory_space<vmem>>, vector<1x128x128xf32>
    %140 = vector.shape_cast %139 : vector<1x128x128xf32> to vector<128x128xf32>
    %cst_58 = arith.constant dense<0.000000e+00> : vector<24x128xf32>
    %141 = tpu.matmul %137, %140, %cst_58 {dimension_numbers = #tpu.dot_dimension_numbers<[1], [0], [0], [1], [0, 0, 1, 1], [], []>} : vector<24x128xf32>, vector<128x128xf32>, vector<24x128xf32> -> vector<24x128xf32>
    %cst_59 = arith.constant dense<0.000000e+00> : vector<24x128xf32>
    %142 = tpu.matmul %29, %141, %cst_59 {dimension_numbers = #tpu.dot_dimension_numbers<[1], [0], [0], [1], [0, 0, 1, 1], [], []>} : vector<24x24xf32>, vector<24x128xf32>, vector<24x128xf32> -> vector<24x128xf32>
    %143 = arith.index_cast %c2_i32 : i32 to index
    %c0_60 = arith.constant 0 : index
    %c0_61 = arith.constant 0 : index
    %144 = vector.load %arg7[%143, %c0_60, %c0_61] : memref<3x1x128xf32, #tpu.memory_space<vmem>>, vector<1x1x128xf32>
    %145 = vector.shape_cast %144 : vector<1x1x128xf32> to vector<1x128xf32>
    %146 = vector.broadcast %145 : vector<1x128xf32> to vector<24x128xf32>
    %147 = arith.addf %142, %146 : vector<24x128xf32>
    %cst_62 = arith.constant 0.000000e+00 : f32
    %148 = vector.broadcast %cst_62 : f32 to vector<24x128xf32>
    %149 = arith.maximumf %147, %148 : vector<24x128xf32>
    %c3_i32 = arith.constant 3 : i32
    %c0_63 = arith.constant 0 : index
    %c0_64 = arith.constant 0 : index
    %150 = vector.load %arg16[%c0_63, %c0_64] : memref<24x128xf32, #tpu.memory_space<vmem>>, vector<24x128xf32>
    tpu.vector_store %arg16[%c0_63, %c0_64], %149 {strides = array<i32>} : memref<24x128xf32, #tpu.memory_space<vmem>>, vector<24x128xf32>,
    %c0_65 = arith.constant 0 : index
    %c0_66 = arith.constant 0 : index
    %151 = vector.load %arg9[%c0_65, %c0_66] : memref<3x24xf32, #tpu.memory_space<vmem>>, vector<3x24xf32>
    %cst_67 = arith.constant dense<0.000000e+00> : vector<3x128xf32>
    %152 = tpu.matmul %151, %149, %cst_67 {dimension_numbers = #tpu.dot_dimension_numbers<[1], [0], [0], [1], [0, 0, 1, 1], [], []>} : vector<3x24xf32>, vector<24x128xf32>, vector<3x128xf32> -> vector<3x128xf32>
    %c0_i32_68 = arith.constant 0 : i32
    %153 = arith.index_cast %c0_i32_68 : i32 to index
    %c0_69 = arith.constant 0 : index
    %c0_70 = arith.constant 0 : index
    %154 = vector.load %arg10[%153, %c0_69, %c0_70] : memref<1x1x128xf32, #tpu.memory_space<vmem>>, vector<1x1x128xf32>
    %155 = vector.shape_cast %154 : vector<1x1x128xf32> to vector<1x128xf32>
    %156 = arith.index_cast %c0_i32_68 : i32 to index
    %c0_71 = arith.constant 0 : index
    %c0_72 = arith.constant 0 : index
    %157 = vector.load %arg11[%156, %c0_71, %c0_72] : memref<1x1x128xf32, #tpu.memory_space<vmem>>, vector<1x1x128xf32>
    %158 = vector.shape_cast %157 : vector<1x1x128xf32> to vector<1x128xf32>
    %cst_73 = arith.constant dense<0.000000e+00> : vector<128xf32>
    %159 = vector.multi_reduction <add>, %152, %cst_73 [0] : vector<3x128xf32> to vector<128xf32>
    %160 = vector.shape_cast %159 : vector<128xf32> to vector<1x128xf32>
    %cst_74 = arith.constant 3.000000e+00 : f32
    %161 = vector.broadcast %cst_74 : f32 to vector<1x128xf32>
    %162 = arith.divf %160, %161 : vector<1x128xf32>
    %163 = vector.broadcast %162 : vector<1x128xf32> to vector<3x128xf32>
    %164 = arith.subf %152, %163 : vector<3x128xf32>
    %165 = arith.mulf %164, %164 : vector<3x128xf32>
    %cst_75 = arith.constant dense<0.000000e+00> : vector<128xf32>
    %166 = vector.multi_reduction <add>, %165, %cst_75 [0] : vector<3x128xf32> to vector<128xf32>
    %167 = vector.shape_cast %166 : vector<128xf32> to vector<1x128xf32>
    %cst_76 = arith.constant 3.000000e+00 : f32
    %168 = vector.broadcast %cst_76 : f32 to vector<1x128xf32>
    %169 = arith.divf %167, %168 : vector<1x128xf32>
    %170 = vector.broadcast %162 : vector<1x128xf32> to vector<3x128xf32>
    %171 = arith.subf %152, %170 : vector<3x128xf32>
    %cst_77 = arith.constant 9.99999974E-6 : f32
    %172 = vector.broadcast %cst_77 : f32 to vector<1x128xf32>
    %173 = arith.addf %169, %172 : vector<1x128xf32>
    %174 = math.rsqrt %173 : vector<1x128xf32>
    %175 = vector.broadcast %174 : vector<1x128xf32> to vector<3x128xf32>
    %176 = arith.mulf %171, %175 : vector<3x128xf32>
    %177 = vector.broadcast %155 : vector<1x128xf32> to vector<3x128xf32>
    %178 = arith.mulf %176, %177 : vector<3x128xf32>
    %179 = vector.broadcast %158 : vector<1x128xf32> to vector<3x128xf32>
    %180 = arith.addf %178, %179 : vector<3x128xf32>
    %181 = arith.index_cast %c0_i32_68 : i32 to index
    %c0_78 = arith.constant 0 : index
    %c0_79 = arith.constant 0 : index
    %182 = vector.load %arg12[%181, %c0_78, %c0_79] : memref<1x128x128xf32, #tpu.memory_space<vmem>>, vector<1x128x128xf32>
    %183 = vector.shape_cast %182 : vector<1x128x128xf32> to vector<128x128xf32>
    %cst_80 = arith.constant dense<0.000000e+00> : vector<3x128xf32>
    %184 = tpu.matmul %180, %183, %cst_80 {dimension_numbers = #tpu.dot_dimension_numbers<[1], [0], [0], [1], [0, 0, 1, 1], [], []>} : vector<3x128xf32>, vector<128x128xf32>, vector<3x128xf32> -> vector<3x128xf32>
    %185 = arith.index_cast %c0_i32_68 : i32 to index
    %c0_81 = arith.constant 0 : index
    %c0_82 = arith.constant 0 : index
    %186 = vector.load %arg13[%185, %c0_81, %c0_82] : memref<1x1x128xf32, #tpu.memory_space<vmem>>, vector<1x1x128xf32>
    %187 = vector.shape_cast %186 : vector<1x1x128xf32> to vector<1x128xf32>
    %188 = vector.broadcast %187 : vector<1x128xf32> to vector<3x128xf32>
    %189 = arith.addf %184, %188 : vector<3x128xf32>
    %cst_83 = arith.constant 0.000000e+00 : f32
    %190 = vector.broadcast %cst_83 : f32 to vector<3x128xf32>
    %191 = arith.maximumf %189, %190 : vector<3x128xf32>
    %c1_i32_84 = arith.constant 1 : i32
    %c0_85 = arith.constant 0 : index
    %c0_86 = arith.constant 0 : index
    %192 = vector.load %arg14[%c0_85, %c0_86] : memref<1x128xf32, #tpu.memory_space<vmem>>, vector<1x128xf32>
    %c0_87 = arith.constant 0 : index
    %c0_88 = arith.constant 0 : index
    %193 = vector.load %arg15[%c0_87, %c0_88] : memref<1x128xf32, #tpu.memory_space<vmem>>, vector<1x128xf32>
    %cst_89 = arith.constant dense<0.000000e+00> : vector<128xf32>
    %194 = vector.multi_reduction <add>, %191, %cst_89 [0] : vector<3x128xf32> to vector<128xf32>
    %195 = vector.shape_cast %194 : vector<128xf32> to vector<1x128xf32>
    %cst_90 = arith.constant 3.000000e+00 : f32
    %196 = vector.broadcast %cst_90 : f32 to vector<1x128xf32>
    %197 = arith.divf %195, %196 : vector<1x128xf32>
    %198 = vector.broadcast %197 : vector<1x128xf32> to vector<3x128xf32>
    %199 = arith.subf %191, %198 : vector<3x128xf32>
    %200 = arith.mulf %199, %199 : vector<3x128xf32>
    %cst_91 = arith.constant dense<0.000000e+00> : vector<128xf32>
    %201 = vector.multi_reduction <add>, %200, %cst_91 [0] : vector<3x128xf32> to vector<128xf32>
    %202 = vector.shape_cast %201 : vector<128xf32> to vector<1x128xf32>
    %cst_92 = arith.constant 3.000000e+00 : f32
    %203 = vector.broadcast %cst_92 : f32 to vector<1x128xf32>
    %204 = arith.divf %202, %203 : vector<1x128xf32>
    %205 = vector.broadcast %197 : vector<1x128xf32> to vector<3x128xf32>
    %206 = arith.subf %191, %205 : vector<3x128xf32>
    %cst_93 = arith.constant 9.99999974E-6 : f32
    %207 = vector.broadcast %cst_93 : f32 to vector<1x128xf32>
    %208 = arith.addf %204, %207 : vector<1x128xf32>
    %209 = math.rsqrt %208 : vector<1x128xf32>
    %210 = vector.broadcast %209 : vector<1x128xf32> to vector<3x128xf32>
    %211 = arith.mulf %206, %210 : vector<3x128xf32>
    %212 = vector.broadcast %192 : vector<1x128xf32> to vector<3x128xf32>
    %213 = arith.mulf %211, %212 : vector<3x128xf32>
    %214 = vector.broadcast %193 : vector<1x128xf32> to vector<3x128xf32>
    %215 = arith.addf %213, %214 : vector<3x128xf32>
    %c0_94 = arith.constant 0 : index
    %c0_95 = arith.constant 0 : index
    %216 = vector.load %arg17[%c0_94, %c0_95] : memref<3x128xf32, #tpu.memory_space<vmem>>, vector<3x128xf32>
    tpu.vector_store %arg17[%c0_94, %c0_95], %215 {strides = array<i32>} : memref<3x128xf32, #tpu.memory_space<vmem>>, vector<3x128xf32>,
    return
  }
}

</mosaic_0001>

<llo_original>
// kernel: tpu_custom_call.1
$region0: #{tpu_custom_call.1}
  #allocation0 [shape = 'u32[]', space=smem, size = 0x4, offset = 0x4, fixed_abs, tag = 'smem constant byte address 0x4 - core index']
  #allocation1 [shape = 'u32[72,128]{1,0:T(1,128)}', space=vmem, size = 0x9000, scoped, tag = 'internal scratch']
  %s0 = inlined_call_operand.hbm [shape: f32[24,128], index: 0, kind: input, shape index: {}]
  %s1 = inlined_call_operand.hbm [shape: f32[1,128], index: 1, kind: input, shape index: {}]
  %s2 = inlined_call_operand.hbm [shape: f32[1,128], index: 2, kind: input, shape index: {}]
  %s3 = inlined_call_operand.hbm [shape: f32[128,128], index: 3, kind: input, shape index: {}]
  %s4 = inlined_call_operand.vmem [shape: f32[3,1,128], index: 4, kind: input, shape index: {}]
  %s5 = inlined_call_operand.hbm [shape: f32[3,1,128], index: 5, kind: input, shape index: {}]
  %s6 = inlined_call_operand.hbm [shape: f32[3,128,128], index: 6, kind: input, shape index: {}]
  %s7 = inlined_call_operand.hbm [shape: f32[3,1,128], index: 7, kind: input, shape index: {}]
  %s8 = inlined_call_operand.hbm [shape: f32[24,24], index: 8, kind: input, shape index: {}]
  %s9 = inlined_call_operand.vmem [shape: f32[3,24], index: 9, kind: input, shape index: {}]
  %s10 = inlined_call_operand.vmem [shape: f32[1,1,128], index: 10, kind: input, shape index: {}]
  %s11 = inlined_call_operand.vmem [shape: f32[1,1,128], index: 11, kind: input, shape index: {}]
  %s12 = inlined_call_operand.hbm [shape: f32[1,128,128], index: 12, kind: input, shape index: {}]
  %s13 = inlined_call_operand.vmem [shape: f32[1,1,128], index: 13, kind: input, shape index: {}]
  %s14 = inlined_call_operand.vmem [shape: f32[1,128], index: 14, kind: input, shape index: {}]
  %s15 = inlined_call_operand.vmem [shape: f32[1,128], index: 15, kind: input, shape index: {}]
  %s16 = inlined_call_operand.hbm [shape: f32[24,128], index: 16, kind: output, shape index: {0}]
  %s17 = inlined_call_operand.hbm [shape: f32[3,128], index: 17, kind: output, shape index: {1}]
  %18 = xla_tuple %s16, %s17
  %s19 = sld [smem:[#allocation0]]
  $region118: #{tpu_custom_call.1} parent=0
    _
  %s21 = ssub.s32 1, %s19
  %s22 = scalar_select 0, %s21, %s19
  $region1: #{tpu_custom_call.1} parent=0
    #allocation2 [shape = 'u8[12288]{0}', space=vmem, size = 0x3000, scoped, tag = 'input window, operand 0, single buffered']
    #allocation3 [shape = 's32[1]{0}', space=sflag, size = 0x4, scoped, tag = 'scoped memory for tpu_custom_call.1']
    #allocation4 [shape = 's32[1]{0}', space=sflag, size = 0x4, scoped, tag = 'scoped memory for tpu_custom_call.1']
    #allocation5 [shape = 'u8[512]{0}', space=vmem, size = 0x400, scoped, tag = 'input window, operand 1, single buffered']
    #allocation6 [shape = 's32[1]{0}', space=sflag, size = 0x4, scoped, tag = 'scoped memory for tpu_custom_call.1']
    #allocation7 [shape = 'u8[512]{0}', space=vmem, size = 0x400, scoped, tag = 'input window, operand 2, single buffered']
    #allocation8 [shape = 'u8[65536]{0}', space=vmem, size = 0x10000, scoped, tag = 'input window, operand 3, single buffered']
    #allocation9 [shape = 's32[1]{0}', space=sflag, size = 0x4, scoped, tag = 'scoped memory for tpu_custom_call.1']
    #allocation10 [shape = 'u8[1536]{0}', space=vmem, size = 0x800, scoped, tag = 'input window, operand 5, single buffered']
    #allocation11 [shape = 'u8[196608]{0}', space=vmem, size = 0x30000, scoped, tag = 'input window, operand 6, single buffered']
    #allocation12 [shape = 's32[1]{0}', space=sflag, size = 0x4, scoped, tag = 'scoped memory for tpu_custom_call.1']
    #allocation13 [shape = 'u8[1536]{0}', space=vmem, size = 0x800, scoped, tag = 'input window, operand 7, single buffered']
    #allocation14 [shape = 'u8[12288]{0}', space=vmem, size = 0x3000, scoped, tag = 'input window, operand 8, single buffered']
    #allocation15 [shape = 's32[1]{0}', space=sflag, size = 0x4, scoped, tag = 'scoped memory for tpu_custom_call.1']
    #allocation16 [shape = 'u8[65536]{0}', space=vmem, size = 0x10000, scoped, tag = 'input window, operand 12, single buffered']
    #allocation17 [shape = 'u8[12288]{0}', space=vmem, size = 0x3000, scoped, tag = 'output window, operand 0, single buffered']
    #allocation18 [shape = 'u8[2048]{0}', space=vmem, size = 0x800, scoped, tag = 'output window, operand 1, single buffered']
    #allocation19 [shape = 's32[1]{0}', space=sflag, size = 0x4, scoped, tag = 'scoped memory for tpu_custom_call.1']
    %23 = vsyncpa [#allocation3], 0
    %24 = vsyncpa [#allocation6], 0
    %25 = vsyncpa [#allocation9], 0
    %26 = vsyncpa [#allocation12], 0
    %27 = vsyncpa [#allocation15], 0
    %28 = vsyncpa [#allocation4], 0
    %29 = vsyncpa [#allocation19], 0
    // Predicated region
    $region2: #{tpu_custom_call.1} parent=1 // pred_check
      _
    $region3: #{tpu_custom_call.1} parent=1 // pred_check_branch
      %31 = sbr.rel (0) target = $region5
    $region4: #{tpu_custom_call.1} parent=1 // pred_region
      %33 = vsyncadd [#allocation3], 0
      %s34 = sshll.u32 %s0, 4
      %s35 = int_to_ptr.hbm [resolvable:$true] %s34
      %s36 = sshll.u32 [#allocation2], 4
      %s37 = int_to_ptr.vmem [resolvable:$true] %s36
      %42 = dma.hbm_to_vmem [thread:$0]  %s35, 384, %s37, [#allocation3], 128, 128, 8
    $region5: #{tpu_custom_call.1} parent=1 // pred_fallthru
      _
    // Predicated region
    $region6: #{tpu_custom_call.1} parent=1 // pred_check
      _
    $region7: #{tpu_custom_call.1} parent=1 // pred_check_branch
      %44 = sbr.rel (0) target = $region9
    $region8: #{tpu_custom_call.1} parent=1 // pred_region
      %46 = vsyncadd [#allocation6], 0
      %s48 = sshll.u32 %s1, 4
      %s49 = int_to_ptr.hbm [resolvable:$true] %s48
      %s50 = sshll.u32 [#allocation5], 4
      %s51 = int_to_ptr.vmem [resolvable:$true] %s50
      %53 = dma.hbm_to_vmem [thread:$0]  %s49, 16, %s51, [#allocation6]
    $region9: #{tpu_custom_call.1} parent=1 // pred_fallthru
      _
    // Predicated region
    $region10: #{tpu_custom_call.1} parent=1 // pred_check
      _
    $region11: #{tpu_custom_call.1} parent=1 // pred_check_branch
      %55 = sbr.rel (0) target = $region13
    $region12: #{tpu_custom_call.1} parent=1 // pred_region
      %57 = vsyncadd [#allocation6], 0
      %s59 = sshll.u32 %s2, 4
      %s60 = int_to_ptr.hbm [resolvable:$true] %s59
      %s61 = sshll.u32 [#allocation7], 4
      %s62 = int_to_ptr.vmem [resolvable:$true] %s61
      %64 = dma.hbm_to_vmem [thread:$0]  %s60, 16, %s62, [#allocation6]
    $region13: #{tpu_custom_call.1} parent=1 // pred_fallthru
      _
    // Predicated region
    $region14: #{tpu_custom_call.1} parent=1 // pred_check
      _
    $region15: #{tpu_custom_call.1} parent=1 // pred_check_branch
      %66 = sbr.rel (0) target = $region17
    $region16: #{tpu_custom_call.1} parent=1 // pred_region
      %68 = vsyncadd [#allocation9], 0
      %s69 = sshll.u32 %s3, 4
      %s70 = int_to_ptr.hbm [resolvable:$true] %s69
      %s71 = sshll.u32 [#allocation8], 4
      %s72 = int_to_ptr.vmem [resolvable:$true] %s71
      %77 = dma.hbm_to_vmem [thread:$0]  %s70, 2048, %s72, [#allocation9], 128, 128, 8
    $region17: #{tpu_custom_call.1} parent=1 // pred_fallthru
      _
    // Predicated region
    $region18: #{tpu_custom_call.1} parent=1 // pred_check
      _
    $region19: #{tpu_custom_call.1} parent=1 // pred_check_branch
      %79 = sbr.rel (0) target = $region21
    $region20: #{tpu_custom_call.1} parent=1 // pred_region
      _
    $region21: #{tpu_custom_call.1} parent=1 // pred_fallthru
      _
    // Predicated region
    $region22: #{tpu_custom_call.1} parent=1 // pred_check
      _
    $region23: #{tpu_custom_call.1} parent=1 // pred_check_branch
      %81 = sbr.rel (0) target = $region25
    $region24: #{tpu_custom_call.1} parent=1 // pred_region
      %83 = vsyncadd [#allocation9], 0
      %s84 = sshll.u32 %s5, 4
      %s85 = int_to_ptr.hbm [resolvable:$true] %s84
      %s86 = sshll.u32 [#allocation10], 4
      %s87 = int_to_ptr.vmem [resolvable:$true] %s86
      %92 = dma.hbm_to_vmem [thread:$0]  %s85, 48, %s87, [#allocation9], 16, 16, 1
    $region25: #{tpu_custom_call.1} parent=1 // pred_fallthru
      _
    // Predicated region
    $region26: #{tpu_custom_call.1} parent=1 // pred_check
      _
    $region27: #{tpu_custom_call.1} parent=1 // pred_check_branch
      %94 = sbr.rel (0) target = $region29
    $region28: #{tpu_custom_call.1} parent=1 // pred_region
      %96 = vsyncadd [#allocation12], 0
      %s97 = sshll.u32 %s6, 4
      %s98 = int_to_ptr.hbm [resolvable:$true] %s97
      %s99 = sshll.u32 [#allocation11], 4
      %s100 = int_to_ptr.vmem [resolvable:$true] %s99
      %105 = dma.hbm_to_vmem [thread:$0]  %s98, 6144, %s100, [#allocation12], 128, 128, 8
    $region29: #{tpu_custom_call.1} parent=1 // pred_fallthru
      _
    // Predicated region
    $region30: #{tpu_custom_call.1} parent=1 // pred_check
      _
    $region31: #{tpu_custom_call.1} parent=1 // pred_check_branch
      %107 = sbr.rel (0) target = $region33
    $region32: #{tpu_custom_call.1} parent=1 // pred_region
      %109 = vsyncadd [#allocation12], 0
      %s110 = sshll.u32 %s7, 4
      %s111 = int_to_ptr.hbm [resolvable:$true] %s110
      %s112 = sshll.u32 [#allocation13], 4
      %s113 = int_to_ptr.vmem [resolvable:$true] %s112
      %118 = dma.hbm_to_vmem [thread:$0]  %s111, 48, %s113, [#allocation12], 16, 16, 1
    $region33: #{tpu_custom_call.1} parent=1 // pred_fallthru
      _
    // Predicated region
    $region34: #{tpu_custom_call.1} parent=1 // pred_check
      _
    $region35: #{tpu_custom_call.1} parent=1 // pred_check_branch
      %120 = sbr.rel (0) target = $region37
    $region36: #{tpu_custom_call.1} parent=1 // pred_region
      %122 = vsyncadd [#allocation15], 0
      %s123 = sshll.u32 %s8, 4
      %s124 = int_to_ptr.hbm [resolvable:$true] %s123
      %s125 = sshll.u32 [#allocation14], 4
      %s126 = int_to_ptr.vmem [resolvable:$true] %s125
      %131 = dma.hbm_to_vmem [thread:$0]  %s124, 384, %s126, [#allocation15], 128, 128, 8
    $region37: #{tpu_custom_call.1} parent=1 // pred_fallthru
      _
    // Predicated region
    $region38: #{tpu_custom_call.1} parent=1 // pred_check
      _
    $region39: #{tpu_custom_call.1} parent=1 // pred_check_branch
      %133 = sbr.rel (0) target = $region41
    $region40: #{tpu_custom_call.1} parent=1 // pred_region
      _
    $region41: #{tpu_custom_call.1} parent=1 // pred_fallthru
      _
    // Predicated region
    $region42: #{tpu_custom_call.1} parent=1 // pred_check
      _
    $region43: #{tpu_custom_call.1} parent=1 // pred_check_branch
      %135 = sbr.rel (0) target = $region45
    $region44: #{tpu_custom_call.1} parent=1 // pred_region
      _
    $region45: #{tpu_custom_call.1} parent=1 // pred_fallthru
      _
    // Predicated region
    $region46: #{tpu_custom_call.1} parent=1 // pred_check
      _
    $region47: #{tpu_custom_call.1} parent=1 // pred_check_branch
      %137 = sbr.rel (0) target = $region49
    $region48: #{tpu_custom_call.1} parent=1 // pred_region
      _
    $region49: #{tpu_custom_call.1} parent=1 // pred_fallthru
      _
    // Predicated region
    $region50: #{tpu_custom_call.1} parent=1 // pred_check
      _
    $region51: #{tpu_custom_call.1} parent=1 // pred_check_branch
      %139 = sbr.rel (0) target = $region53
    $region52: #{tpu_custom_call.1} parent=1 // pred_region
      %141 = vsyncadd [#allocation15], 0
      %s142 = sshll.u32 %s12, 4
      %s143 = int_to_ptr.hbm [resolvable:$true] %s142
      %s144 = sshll.u32 [#allocation16], 4
      %s145 = int_to_ptr.vmem [resolvable:$true] %s144
      %150 = dma.hbm_to_vmem [thread:$0]  %s143, 2048, %s145, [#allocation15], 128, 128, 8
    $region53: #{tpu_custom_call.1} parent=1 // pred_fallthru
      _
    // Predicated region
    $region54: #{tpu_custom_call.1} parent=1 // pred_check
      _
    $region55: #{tpu_custom_call.1} parent=1 // pred_check_branch
      %152 = sbr.rel (0) target = $region57
    $region56: #{tpu_custom_call.1} parent=1 // pred_region
      _
    $region57: #{tpu_custom_call.1} parent=1 // pred_fallthru
      _
    // Predicated region
    $region58: #{tpu_custom_call.1} parent=1 // pred_check
      _
    $region59: #{tpu_custom_call.1} parent=1 // pred_check_branch
      %154 = sbr.rel (0) target = $region61
    $region60: #{tpu_custom_call.1} parent=1 // pred_region
      _
    $region61: #{tpu_custom_call.1} parent=1 // pred_fallthru
      _
    // Predicated region
    $region62: #{tpu_custom_call.1} parent=1 // pred_check
      _
    $region63: #{tpu_custom_call.1} parent=1 // pred_check_branch
      %156 = sbr.rel (0) target = $region65
    $region64: #{tpu_custom_call.1} parent=1 // pred_region
      _
    $region65: #{tpu_custom_call.1} parent=1 // pred_fallthru
      _
    // Predicated region
    $region66: #{tpu_custom_call.1} parent=1 // pred_check
      _
    $region67: #{tpu_custom_call.1} parent=1 // pred_check_branch
      %158 = sbr.rel (0) target = $region69
    $region68: #{tpu_custom_call.1} parent=1 // pred_region
      %160 = dma.done [#allocation3], 384
    $region69: #{tpu_custom_call.1} parent=1 // pred_fallthru
      _
    // Predicated region
    $region70: #{tpu_custom_call.1} parent=1 // pred_check
      _
    $region71: #{tpu_custom_call.1} parent=1 // pred_check_branch
      %162 = sbr.rel (0) target = $region73
    $region72: #{tpu_custom_call.1} parent=1 // pred_region
      %164 = dma.done [#allocation6], 16
    $region73: #{tpu_custom_call.1} parent=1 // pred_fallthru
      _
    // Predicated region
    $region74: #{tpu_custom_call.1} parent=1 // pred_check
      _
    $region75: #{tpu_custom_call.1} parent=1 // pred_check_branch
      %166 = sbr.rel (0) target = $region77
    $region76: #{tpu_custom_call.1} parent=1 // pred_region
      %168 = dma.done [#allocation6], 16
    $region77: #{tpu_custom_call.1} parent=1 // pred_fallthru
      _
    // Predicated region
    $region78: #{tpu_custom_call.1} parent=1 // pred_check
      _
    $region79: #{tpu_custom_call.1} parent=1 // pred_check_branch
      %170 = sbr.rel (0) target = $region81
    $region80: #{tpu_custom_call.1} parent=1 // pred_region
      %172 = dma.done [#allocation9], 2048
    $region81: #{tpu_custom_call.1} parent=1 // pred_fallthru
      _
    // Predicated region
    $region82: #{tpu_custom_call.1} parent=1 // pred_check
      _
    $region83: #{tpu_custom_call.1} parent=1 // pred_check_branch
      %174 = sbr.rel (0) target = $region85
    $region84: #{tpu_custom_call.1} parent=1 // pred_region
      %176 = dma.done [#allocation9], 48
    $region85: #{tpu_custom_call.1} parent=1 // pred_fallthru
      _
    // Predicated region
    $region86: #{tpu_custom_call.1} parent=1 // pred_check
      _
    $region87: #{tpu_custom_call.1} parent=1 // pred_check_branch
      %178 = sbr.rel (0) target = $region89
    $region88: #{tpu_custom_call.1} parent=1 // pred_region
      %180 = dma.done [#allocation12], 6144
    $region89: #{tpu_custom_call.1} parent=1 // pred_fallthru
      _
    // Predicated region
    $region90: #{tpu_custom_call.1} parent=1 // pred_check
      _
    $region91: #{tpu_custom_call.1} parent=1 // pred_check_branch
      %182 = sbr.rel (0) target = $region93
    $region92: #{tpu_custom_call.1} parent=1 // pred_region
      %184 = dma.done [#allocation12], 48
    $region93: #{tpu_custom_call.1} parent=1 // pred_fallthru
      _
    // Predicated region
    $region94: #{tpu_custom_call.1} parent=1 // pred_check
      _
    $region95: #{tpu_custom_call.1} parent=1 // pred_check_branch
      %186 = sbr.rel (0) target = $region97
    $region96: #{tpu_custom_call.1} parent=1 // pred_region
      %188 = dma.done [#allocation15], 384
    $region97: #{tpu_custom_call.1} parent=1 // pred_fallthru
      _
    // Predicated region
    $region98: #{tpu_custom_call.1} parent=1 // pred_check
      _
    $region99: #{tpu_custom_call.1} parent=1 // pred_check_branch
      %190 = sbr.rel (0) target = $region101
    $region100: #{tpu_custom_call.1} parent=1 // pred_region
      %192 = dma.done [#allocation15], 2048
    $region101: #{tpu_custom_call.1} parent=1 // pred_fallthru
      _
    %v193 = vld [vmem:[#allocation2] sm:$0xff]
    %v194 = vld [vmem:[#allocation2 + $0x8] sm:$0xff]
    %v195 = vld [vmem:[#allocation2 + $0x10] sm:$0xff]
    %v196 = vld [vmem:[#allocation5] sm:$0x1]
    %v197 = vld [vmem:[#allocation7] sm:$0x1]
    %v198 = vadd.f32 %v193, %v194
    %v199 = vadd.f32 %v198, %v195
    %v200 = vrot.slane %v199, 4
    %v201 = vadd.f32 %v199, %v200
    %v202 = vrot.slane %v201, 2
    %v203 = vadd.f32 %v201, %v202
    %v204 = vrot.slane %v203, 1
    %v205 = vadd.f32 %v203, %v204
    %v206 = vrcp.pop 24.0
    %v207 = vmul.f32 24.0, %v206
    %v208 = vsub.f32 1.0, %v207
    %v209 = vmul.f32 %v206, %v208
    %v210 = vadd.f32 %v206, %v209
    %vm211 = vweird.f32 %v206
    %v212 = vsel %vm211, %v206, %v210
    %v213 = vmul.f32 %v205, %v212
    %v214 = vsub.f32 %v193, %v213
    %v215 = vsub.f32 %v194, %v213
    %v216 = vsub.f32 %v195, %v213
    %v217 = vmul.f32 %v214, %v214
    %v218 = vmul.f32 %v215, %v215
    %v219 = vmul.f32 %v216, %v216
    %v220 = vadd.f32 %v217, %v218
    %v221 = vadd.f32 %v220, %v219
    %v222 = vrot.slane %v221, 4
    %v223 = vadd.f32 %v221, %v222
    %v224 = vrot.slane %v223, 2
    %v225 = vadd.f32 %v223, %v224
    %v226 = vrot.slane %v225, 1
    %v227 = vadd.f32 %v225, %v226
    %v228 = vmul.f32 %v227, %v212
    %v229 = vadd.f32 %v228, 1e-05
    %v230 = vrsqrt.pop %v229
    %v231 = vmul.f32 %v230, %v229
    %v232 = vmul.f32 %v231, %v230
    %v233 = vmul.f32 0.5, %v232
    %v234 = vsub.f32 1.5, %v233
    %v235 = vmul.f32 %v230, %v234
    %vm236 = vweird.f32 %v229
    %vm237 = vweird.f32 %v230
    %vm238 = vmor %vm236, %vm237
    %v239 = vsel %vm238, %v230, %v235
    %v240 = vmul.f32 %v214, %v239
    %v241 = vmul.f32 %v215, %v239
    %v242 = vmul.f32 %v216, %v239
    %v244 = vperm.slane %v196, 0
    %v246 = vmul.f32 %v240, %v244
    %v247 = vmul.f32 %v241, %v244
    %v248 = vmul.f32 %v242, %v244
    %v250 = vperm.slane %v197, 0
    %v252 = vadd.f32 %v246, %v250
    %v253 = vadd.f32 %v247, %v250
    %v254 = vadd.f32 %v248, %v250
    %v255 = vld [vmem:[#allocation8] sm:$0xff]
    %v256 = vld [vmem:[#allocation8 + $0x8] sm:$0xff]
    %v257 = vld [vmem:[#allocation8 + $0x10] sm:$0xff]
    %v258 = vld [vmem:[#allocation8 + $0x18] sm:$0xff]
    %v259 = vld [vmem:[#allocation8 + $0x20] sm:$0xff]
    %v260 = vld [vmem:[#allocation8 + $0x28] sm:$0xff]
    %v261 = vld [vmem:[#allocation8 + $0x30] sm:$0xff]
    %v262 = vld [vmem:[#allocation8 + $0x38] sm:$0xff]
    %v263 = vld [vmem:[#allocation8 + $0x40] sm:$0xff]
    %v264 = vld [vmem:[#allocation8 + $0x48] sm:$0xff]
    %v265 = vld [vmem:[#allocation8 + $0x50] sm:$0xff]
    %v266 = vld [vmem:[#allocation8 + $0x58] sm:$0xff]
    %v267 = vld [vmem:[#allocation8 + $0x60] sm:$0xff]
    %v268 = vld [vmem:[#allocation8 + $0x68] sm:$0xff]
    %v269 = vld [vmem:[#allocation8 + $0x70] sm:$0xff]
    %v270 = vld [vmem:[#allocation8 + $0x78] sm:$0xff]
    %271 = vmatpush.msra.mxu0 %v270
    %272 = vmatpush.msra.mxu0 %v269
    %273 = vmatpush.msra.mxu0 %v268
    %274 = vmatpush.msra.mxu0 %v267
    %275 = vmatpush.msra.mxu0 %v266
    %276 = vmatpush.msra.mxu0 %v265
    %277 = vmatpush.msra.mxu0 %v264
    %278 = vmatpush.msra.mxu0 %v263
    %279 = vmatpush.msra.mxu0 %v262
    %280 = vmatpush.msra.mxu0 %v261
    %281 = vmatpush.msra.mxu0 %v260
    %282 = vmatpush.msra.mxu0 %v259
    %283 = vmatpush.msra.mxu0 %v258
    %284 = vmatpush.msra.mxu0 %v257
    %285 = vmatpush.msra.mxu0 %v256
    %286 = vmatpush.msra.mxu0 %v255
    %287 = vmatmul.f32.gmra.mxu0 %v252
    %v288 = vpop.f32.mrf.mxu0
    %v289 = vadd.f32 0.0, %v288
    %290 = vmatmul.f32.gmra.mxu0 %v253
    %v291 = vpop.f32.mrf.mxu0
    %v292 = vadd.f32 0.0, %v291
    %293 = vmatmul.f32.gmra.mxu0 %v254
    %v294 = vpop.f32.mrf.mxu0
    %v295 = vadd.f32 0.0, %v294
    %296 = vdwg.mxu0
    %v297 = vmax.f32 %v289, 0.0
    %v298 = vmax.f32 %v292, 0.0
    %v299 = vmax.f32 %v295, 0.0
    %v300 = vld [vmem:[#allocation14] sm:$0xff]
    %v301 = vld [vmem:[#allocation14 + $0x8] sm:$0xff]
    %v302 = vld [vmem:[#allocation14 + $0x10] sm:$0xff]
    %v303 = vld [vmem:[%s4] sm:$0x1]
    %v304 = vld [vmem:[#allocation10] sm:$0x1]
    %v305 = vadd.f32 %v297, %v298
    %v306 = vadd.f32 %v305, %v299
    %v307 = vrot.slane %v306, 4
    %v308 = vadd.f32 %v306, %v307
    %v309 = vrot.slane %v308, 2
    %v310 = vadd.f32 %v308, %v309
    %v311 = vrot.slane %v310, 1
    %v312 = vadd.f32 %v310, %v311
    %v313 = vmul.f32 %v312, %v212
    %v314 = vsub.f32 %v297, %v313
    %v315 = vsub.f32 %v298, %v313
    %v316 = vsub.f32 %v299, %v313
    %v317 = vmul.f32 %v314, %v314
    %v318 = vmul.f32 %v315, %v315
    %v319 = vmul.f32 %v316, %v316
    %v320 = vadd.f32 %v317, %v318
    %v321 = vadd.f32 %v320, %v319
    %v322 = vrot.slane %v321, 4
    %v323 = vadd.f32 %v321, %v322
    %v324 = vrot.slane %v323, 2
    %v325 = vadd.f32 %v323, %v324
    %v326 = vrot.slane %v325, 1
    %v327 = vadd.f32 %v325, %v326
    %v328 = vmul.f32 %v327, %v212
    %v329 = vadd.f32 %v328, 1e-05
    %v330 = vrsqrt.pop %v329
    %v331 = vmul.f32 %v330, %v329
    %v332 = vmul.f32 %v331, %v330
    %v333 = vmul.f32 0.5, %v332
    %v334 = vsub.f32 1.5, %v333
    %v335 = vmul.f32 %v330, %v334
    %vm336 = vweird.f32 %v329
    %vm337 = vweird.f32 %v330
    %vm338 = vmor %vm336, %vm337
    %v339 = vsel %vm338, %v330, %v335
    %v340 = vmul.f32 %v314, %v339
    %v341 = vmul.f32 %v315, %v339
    %v342 = vmul.f32 %v316, %v339
    %v344 = vperm.slane %v303, 0
    %v346 = vmul.f32 %v340, %v344
    %v347 = vmul.f32 %v341, %v344
    %v348 = vmul.f32 %v342, %v344
    %v350 = vperm.slane %v304, 0
    %v352 = vadd.f32 %v346, %v350
    %v353 = vadd.f32 %v347, %v350
    %v354 = vadd.f32 %v348, %v350
    %v355 = vld [vmem:[#allocation11] sm:$0xff]
    %v356 = vld [vmem:[#allocation11 + $0x8] sm:$0xff]
    %v357 = vld [vmem:[#allocation11 + $0x10] sm:$0xff]
    %v358 = vld [vmem:[#allocation11 + $0x18] sm:$0xff]
    %v359 = vld [vmem:[#allocation11 + $0x20] sm:$0xff]
    %v360 = vld [vmem:[#allocation11 + $0x28] sm:$0xff]
    %v361 = vld [vmem:[#allocation11 + $0x30] sm:$0xff]
    %v362 = vld [vmem:[#allocation11 + $0x38] sm:$0xff]
    %v363 = vld [vmem:[#allocation11 + $0x40] sm:$0xff]
    %v364 = vld [vmem:[#allocation11 + $0x48] sm:$0xff]
    %v365 = vld [vmem:[#allocation11 + $0x50] sm:$0xff]
    %v366 = vld [vmem:[#allocation11 + $0x58] sm:$0xff]
    %v367 = vld [vmem:[#allocation11 + $0x60] sm:$0xff]
    %v368 = vld [vmem:[#allocation11 + $0x68] sm:$0xff]
    %v369 = vld [vmem:[#allocation11 + $0x70] sm:$0xff]
    %v370 = vld [vmem:[#allocation11 + $0x78] sm:$0xff]
    %371 = vmatpush.msra.mxu0 %v370
    %372 = vmatpush.msra.mxu0 %v369
    %373 = vmatpush.msra.mxu0 %v368
    %374 = vmatpush.msra.mxu0 %v367
    %375 = vmatpush.msra.mxu0 %v366
    %376 = vmatpush.msra.mxu0 %v365
    %377 = vmatpush.msra.mxu0 %v364
    %378 = vmatpush.msra.mxu0 %v363
    %379 = vmatpush.msra.mxu0 %v362
    %380 = vmatpush.msra.mxu0 %v361
    %381 = vmatpush.msra.mxu0 %v360
    %382 = vmatpush.msra.mxu0 %v359
    %383 = vmatpush.msra.mxu0 %v358
    %384 = vmatpush.msra.mxu0 %v357
    %385 = vmatpush.msra.mxu0 %v356
    %386 = vmatpush.msra.mxu0 %v355
    %387 = vmatmul.f32.gmra.mxu0 %v352
    %v388 = vpop.f32.mrf.mxu0
    %v389 = vadd.f32 0.0, %v388
    %390 = vmatmul.f32.gmra.mxu0 %v353
    %v391 = vpop.f32.mrf.mxu0
    %v392 = vadd.f32 0.0, %v391
    %393 = vmatmul.f32.gmra.mxu0 %v354
    %v394 = vpop.f32.mrf.mxu0
    %v395 = vadd.f32 0.0, %v394
    %396 = vdwg.mxu0
    %v397 = vld [vmem:[#allocation13] sm:$0x1]
    %v399 = vperm.slane %v397, 0
    %vm401 = vcmask 195584
    %v403 = vsel %vm401, %v300, 0
    %v406 = vsel %vm401, %v301, 0
    %v409 = vsel %vm401, %v302, 0
    %411 = vmatpush.msra.mxu0 0.0
    %412 = vmatpush.msra.mxu0 0.0
    %413 = vmatpush.msra.mxu0 0.0
    %414 = vmatpush.msra.mxu0 0.0
    %415 = vmatpush.msra.mxu0 0.0
    %416 = vmatpush.msra.mxu0 0.0
    %417 = vmatpush.msra.mxu0 0.0
    %418 = vmatpush.msra.mxu0 0.0
    %419 = vmatpush.msra.mxu0 0.0
    %420 = vmatpush.msra.mxu0 0.0
    %421 = vmatpush.msra.mxu0 0.0
    %422 = vmatpush.msra.mxu0 0.0
    %423 = vmatpush.msra.mxu0 0.0
    %424 = vmatpush.msra.mxu0 %v395
    %425 = vmatpush.msra.mxu0 %v392
    %426 = vmatpush.msra.mxu0 %v389
    %427 = vmatmul.f32.gmra.mxu0 %v403
    %v428 = vpop.f32.mrf.mxu0
    %v429 = vadd.f32 %v399, %v428
    %430 = vmatmul.f32.gmra.mxu0 %v406
    %v431 = vpop.f32.mrf.mxu0
    %v432 = vadd.f32 %v399, %v431
    %433 = vmatmul.f32.gmra.mxu0 %v409
    %v434 = vpop.f32.mrf.mxu0
    %v435 = vadd.f32 %v399, %v434
    %436 = vdwg.mxu0
    %v437 = vmax.f32 %v429, 0.0
    %v438 = vmax.f32 %v432, 0.0
    %v439 = vmax.f32 %v435, 0.0
    %s440 = scalar_lea.vmem %s4, 1
    %v441 = vld [vmem:[%s440] sm:$0x1]
    %s442 = scalar_lea.vmem [#allocation10], 1
    %v443 = vld [vmem:[%s442] sm:$0x1]
    %v444 = vadd.f32 %v437, %v438
    %v445 = vadd.f32 %v444, %v439
    %v446 = vrot.slane %v445, 4
    %v447 = vadd.f32 %v445, %v446
    %v448 = vrot.slane %v447, 2
    %v449 = vadd.f32 %v447, %v448
    %v450 = vrot.slane %v449, 1
    %v451 = vadd.f32 %v449, %v450
    %v452 = vmul.f32 %v451, %v212
    %v453 = vsub.f32 %v437, %v452
    %v454 = vsub.f32 %v438, %v452
    %v455 = vsub.f32 %v439, %v452
    %v456 = vmul.f32 %v453, %v453
    %v457 = vmul.f32 %v454, %v454
    %v458 = vmul.f32 %v455, %v455
    %v459 = vadd.f32 %v456, %v457
    %v460 = vadd.f32 %v459, %v458
    %v461 = vrot.slane %v460, 4
    %v462 = vadd.f32 %v460, %v461
    %v463 = vrot.slane %v462, 2
    %v464 = vadd.f32 %v462, %v463
    %v465 = vrot.slane %v464, 1
    %v466 = vadd.f32 %v464, %v465
    %v467 = vmul.f32 %v466, %v212
    %v468 = vadd.f32 %v467, 1e-05
    %v469 = vrsqrt.pop %v468
    %v470 = vmul.f32 %v469, %v468
    %v471 = vmul.f32 %v470, %v469
    %v472 = vmul.f32 0.5, %v471
    %v473 = vsub.f32 1.5, %v472
    %v474 = vmul.f32 %v469, %v473
    %vm475 = vweird.f32 %v468
    %vm476 = vweird.f32 %v469
    %vm477 = vmor %vm475, %vm476
    %v478 = vsel %vm477, %v469, %v474
    %v479 = vmul.f32 %v453, %v478
    %v480 = vmul.f32 %v454, %v478
    %v481 = vmul.f32 %v455, %v478
    %v483 = vperm.slane %v441, 0
    %v485 = vmul.f32 %v479, %v483
    %v486 = vmul.f32 %v480, %v483
    %v487 = vmul.f32 %v481, %v483
    %v489 = vperm.slane %v443, 0
    %v491 = vadd.f32 %v485, %v489
    %v492 = vadd.f32 %v486, %v489
    %v493 = vadd.f32 %v487, %v489
    %s494 = scalar_lea.vmem [#allocation11], 128
    %v495 = vld [vmem:[%s494] sm:$0xff]
    %v496 = vld [vmem:[%s494 + $0x8] sm:$0xff]
    %v497 = vld [vmem:[%s494 + $0x10] sm:$0xff]
    %v498 = vld [vmem:[%s494 + $0x18] sm:$0xff]
    %v499 = vld [vmem:[%s494 + $0x20] sm:$0xff]
    %v500 = vld [vmem:[%s494 + $0x28] sm:$0xff]
    %v501 = vld [vmem:[%s494 + $0x30] sm:$0xff]
    %v502 = vld [vmem:[%s494 + $0x38] sm:$0xff]
    %v503 = vld [vmem:[%s494 + $0x40] sm:$0xff]
    %v504 = vld [vmem:[%s494 + $0x48] sm:$0xff]
    %v505 = vld [vmem:[%s494 + $0x50] sm:$0xff]
    %v506 = vld [vmem:[%s494 + $0x58] sm:$0xff]
    %v507 = vld [vmem:[%s494 + $0x60] sm:$0xff]
    %v508 = vld [vmem:[%s494 + $0x68] sm:$0xff]
    %v509 = vld [vmem:[%s494 + $0x70] sm:$0xff]
    %v510 = vld [vmem:[%s494 + $0x78] sm:$0xff]
    %511 = vmatpush.msra.mxu0 %v510
    %512 = vmatpush.msra.mxu0 %v509
    %513 = vmatpush.msra.mxu0 %v508
    %514 = vmatpush.msra.mxu0 %v507
    %515 = vmatpush.msra.mxu0 %v506
    %516 = vmatpush.msra.mxu0 %v505
    %517 = vmatpush.msra.mxu0 %v504
    %518 = vmatpush.msra.mxu0 %v503
    %519 = vmatpush.msra.mxu0 %v502
    %520 = vmatpush.msra.mxu0 %v501
    %521 = vmatpush.msra.mxu0 %v500
    %522 = vmatpush.msra.mxu0 %v499
    %523 = vmatpush.msra.mxu0 %v498
    %524 = vmatpush.msra.mxu0 %v497
    %525 = vmatpush.msra.mxu0 %v496
    %526 = vmatpush.msra.mxu0 %v495
    %527 = vmatmul.f32.gmra.mxu0 %v491
    %v528 = vpop.f32.mrf.mxu0
    %v529 = vadd.f32 0.0, %v528
    %530 = vmatmul.f32.gmra.mxu0 %v492
    %v531 = vpop.f32.mrf.mxu0
    %v532 = vadd.f32 0.0, %v531
    %533 = vmatmul.f32.gmra.mxu0 %v493
    %v534 = vpop.f32.mrf.mxu0
    %v535 = vadd.f32 0.0, %v534
    %536 = vdwg.mxu0
    %s537 = scalar_lea.vmem [#allocation13], 1
    %v538 = vld [vmem:[%s537] sm:$0x1]
    %v540 = vperm.slane %v538, 0
    %542 = vmatpush.msra.mxu0 0.0
    %543 = vmatpush.msra.mxu0 0.0
    %544 = vmatpush.msra.mxu0 0.0
    %545 = vmatpush.msra.mxu0 0.0
    %546 = vmatpush.msra.mxu0 0.0
    %547 = vmatpush.msra.mxu0 0.0
    %548 = vmatpush.msra.mxu0 0.0
    %549 = vmatpush.msra.mxu0 0.0
    %550 = vmatpush.msra.mxu0 0.0
    %551 = vmatpush.msra.mxu0 0.0
    %552 = vmatpush.msra.mxu0 0.0
    %553 = vmatpush.msra.mxu0 0.0
    %554 = vmatpush.msra.mxu0 0.0
    %555 = vmatpush.msra.mxu0 %v535
    %556 = vmatpush.msra.mxu0 %v532
    %557 = vmatpush.msra.mxu0 %v529
    %558 = vmatmul.f32.gmra.mxu0 %v403
    %v559 = vpop.f32.mrf.mxu0
    %v560 = vadd.f32 %v540, %v559
    %561 = vmatmul.f32.gmra.mxu0 %v406
    %v562 = vpop.f32.mrf.mxu0
    %v563 = vadd.f32 %v540, %v562
    %564 = vmatmul.f32.gmra.mxu0 %v409
    %v565 = vpop.f32.mrf.mxu0
    %v566 = vadd.f32 %v540, %v565
    %567 = vdwg.mxu0
    %v568 = vmax.f32 %v560, 0.0
    %v569 = vmax.f32 %v563, 0.0
    %v570 = vmax.f32 %v566, 0.0
    %s571 = scalar_lea.vmem %s4, 2
    %v572 = vld [vmem:[%s571] sm:$0x1]
    %s573 = scalar_lea.vmem [#allocation10], 2
    %v574 = vld [vmem:[%s573] sm:$0x1]
    %v575 = vadd.f32 %v568, %v569
    %v576 = vadd.f32 %v575, %v570
    %v577 = vrot.slane %v576, 4
    %v578 = vadd.f32 %v576, %v577
    %v579 = vrot.slane %v578, 2
    %v580 = vadd.f32 %v578, %v579
    %v581 = vrot.slane %v580, 1
    %v582 = vadd.f32 %v580, %v581
    %v583 = vmul.f32 %v582, %v212
    %v584 = vsub.f32 %v568, %v583
    %v585 = vsub.f32 %v569, %v583
    %v586 = vsub.f32 %v570, %v583
    %v587 = vmul.f32 %v584, %v584
    %v588 = vmul.f32 %v585, %v585
    %v589 = vmul.f32 %v586, %v586
    %v590 = vadd.f32 %v587, %v588
    %v591 = vadd.f32 %v590, %v589
    %v592 = vrot.slane %v591, 4
    %v593 = vadd.f32 %v591, %v592
    %v594 = vrot.slane %v593, 2
    %v595 = vadd.f32 %v593, %v594
    %v596 = vrot.slane %v595, 1
    %v597 = vadd.f32 %v595, %v596
    %v598 = vmul.f32 %v597, %v212
    %v599 = vadd.f32 %v598, 1e-05
    %v600 = vrsqrt.pop %v599
    %v601 = vmul.f32 %v600, %v599
    %v602 = vmul.f32 %v601, %v600
    %v603 = vmul.f32 0.5, %v602
    %v604 = vsub.f32 1.5, %v603
    %v605 = vmul.f32 %v600, %v604
    %vm606 = vweird.f32 %v599
    %vm607 = vweird.f32 %v600
    %vm608 = vmor %vm606, %vm607
    %v609 = vsel %vm608, %v600, %v605
    %v610 = vmul.f32 %v584, %v609
    %v611 = vmul.f32 %v585, %v609
    %v612 = vmul.f32 %v586, %v609
    %v614 = vperm.slane %v572, 0
    %v616 = vmul.f32 %v610, %v614
    %v617 = vmul.f32 %v611, %v614
    %v618 = vmul.f32 %v612, %v614
    %v620 = vperm.slane %v574, 0
    %v622 = vadd.f32 %v616, %v620
    %v623 = vadd.f32 %v617, %v620
    %v624 = vadd.f32 %v618, %v620
    %s625 = scalar_lea.vmem [#allocation11], 256
    %v626 = vld [vmem:[%s625] sm:$0xff]
    %v627 = vld [vmem:[%s625 + $0x8] sm:$0xff]
    %v628 = vld [vmem:[%s625 + $0x10] sm:$0xff]
    %v629 = vld [vmem:[%s625 + $0x18] sm:$0xff]
    %v630 = vld [vmem:[%s625 + $0x20] sm:$0xff]
    %v631 = vld [vmem:[%s625 + $0x28] sm:$0xff]
    %v632 = vld [vmem:[%s625 + $0x30] sm:$0xff]
    %v633 = vld [vmem:[%s625 + $0x38] sm:$0xff]
    %v634 = vld [vmem:[%s625 + $0x40] sm:$0xff]
    %v635 = vld [vmem:[%s625 + $0x48] sm:$0xff]
    %v636 = vld [vmem:[%s625 + $0x50] sm:$0xff]
    %v637 = vld [vmem:[%s625 + $0x58] sm:$0xff]
    %v638 = vld [vmem:[%s625 + $0x60] sm:$0xff]
    %v639 = vld [vmem:[%s625 + $0x68] sm:$0xff]
    %v640 = vld [vmem:[%s625 + $0x70] sm:$0xff]
    %v641 = vld [vmem:[%s625 + $0x78] sm:$0xff]
    %642 = vmatpush.msra.mxu0 %v641
    %643 = vmatpush.msra.mxu0 %v640
    %644 = vmatpush.msra.mxu0 %v639
    %645 = vmatpush.msra.mxu0 %v638
    %646 = vmatpush.msra.mxu0 %v637
    %647 = vmatpush.msra.mxu0 %v636
    %648 = vmatpush.msra.mxu0 %v635
    %649 = vmatpush.msra.mxu0 %v634
    %650 = vmatpush.msra.mxu0 %v633
    %651 = vmatpush.msra.mxu0 %v632
    %652 = vmatpush.msra.mxu0 %v631
    %653 = vmatpush.msra.mxu0 %v630
    %654 = vmatpush.msra.mxu0 %v629
    %655 = vmatpush.msra.mxu0 %v628
    %656 = vmatpush.msra.mxu0 %v627
    %657 = vmatpush.msra.mxu0 %v626
    %658 = vmatmul.f32.gmra.mxu0 %v622
    %v659 = vpop.f32.mrf.mxu0
    %v660 = vadd.f32 0.0, %v659
    %661 = vmatmul.f32.gmra.mxu0 %v623
    %v662 = vpop.f32.mrf.mxu0
    %v663 = vadd.f32 0.0, %v662
    %664 = vmatmul.f32.gmra.mxu0 %v624
    %v665 = vpop.f32.mrf.mxu0
    %v666 = vadd.f32 0.0, %v665
    %667 = vdwg.mxu0
    %s668 = scalar_lea.vmem [#allocation13], 2
    %v669 = vld [vmem:[%s668] sm:$0x1]
    %v671 = vperm.slane %v669, 0
    %673 = vmatpush.msra.mxu0 0.0
    %674 = vmatpush.msra.mxu0 0.0
    %675 = vmatpush.msra.mxu0 0.0
    %676 = vmatpush.msra.mxu0 0.0
    %677 = vmatpush.msra.mxu0 0.0
    %678 = vmatpush.msra.mxu0 0.0
    %679 = vmatpush.msra.mxu0 0.0
    %680 = vmatpush.msra.mxu0 0.0
    %681 = vmatpush.msra.mxu0 0.0
    %682 = vmatpush.msra.mxu0 0.0
    %683 = vmatpush.msra.mxu0 0.0
    %684 = vmatpush.msra.mxu0 0.0
    %685 = vmatpush.msra.mxu0 0.0
    %686 = vmatpush.msra.mxu0 %v666
    %687 = vmatpush.msra.mxu0 %v663
    %688 = vmatpush.msra.mxu0 %v660
    %689 = vmatmul.f32.gmra.mxu0 %v403
    %v690 = vpop.f32.mrf.mxu0
    %v691 = vadd.f32 %v671, %v690
    %692 = vmatmul.f32.gmra.mxu0 %v406
    %v693 = vpop.f32.mrf.mxu0
    %v694 = vadd.f32 %v671, %v693
    %695 = vmatmul.f32.gmra.mxu0 %v409
    %v696 = vpop.f32.mrf.mxu0
    %v697 = vadd.f32 %v671, %v696
    %698 = vdwg.mxu0
    %v699 = vmax.f32 %v691, 0.0
    %v700 = vmax.f32 %v694, 0.0
    %v701 = vmax.f32 %v697, 0.0
    %702 = vst [vmem:[#allocation17] sm:$0xff] %v699
    %703 = vst [vmem:[#allocation17 + $0x8] sm:$0xff] %v700
    %704 = vst [vmem:[#allocation17 + $0x10] sm:$0xff] %v701
    %v705 = vld [vmem:[%s9] sm:$0x7]
    %v707 = vsel %vm401, %v705, 0
    %709 = vmatpush.msra.mxu0 0.0
    %710 = vmatpush.msra.mxu0 0.0
    %711 = vmatpush.msra.mxu0 0.0
    %712 = vmatpush.msra.mxu0 0.0
    %713 = vmatpush.msra.mxu0 0.0
    %714 = vmatpush.msra.mxu0 0.0
    %715 = vmatpush.msra.mxu0 0.0
    %716 = vmatpush.msra.mxu0 0.0
    %717 = vmatpush.msra.mxu0 0.0
    %718 = vmatpush.msra.mxu0 0.0
    %719 = vmatpush.msra.mxu0 0.0
    %720 = vmatpush.msra.mxu0 0.0
    %721 = vmatpush.msra.mxu0 0.0
    %722 = vmatpush.msra.mxu0 %v701
    %723 = vmatpush.msra.mxu0 %v700
    %724 = vmatpush.msra.mxu0 %v699
    %725 = vmatmul.f32.gmra.mxu0 %v707
    %v726 = vpop.f32.mrf.mxu0
    %v727 = vadd.f32 0.0, %v726
    %728 = vdwg.mxu0
    %v729 = vld [vmem:[%s10] sm:$0x1]
    %v730 = vld [vmem:[%s11] sm:$0x1]
    %vm731 = vcmask 1042432
    %v732 = vsel %vm731, %v727, 0.0
    %v733 = vrot.slane %v732, 4
    %v734 = vadd.f32 %v732, %v733
    %v735 = vrot.slane %v734, 2
    %v736 = vadd.f32 %v734, %v735
    %v737 = vrot.slane %v736, 1
    %v738 = vadd.f32 %v736, %v737
    %v739 = vrcp.pop 3.0
    %v740 = vmul.f32 3.0, %v739
    %v741 = vsub.f32 1.0, %v740
    %v742 = vmul.f32 %v739, %v741
    %v743 = vadd.f32 %v739, %v742
    %vm744 = vweird.f32 %v739
    %v745 = vsel %vm744, %v739, %v743
    %v746 = vmul.f32 %v738, %v745
    %v747 = vsub.f32 %v727, %v746
    %v748 = vmul.f32 %v747, %v747
    %v749 = vsel %vm731, %v748, 0.0
    %v750 = vrot.slane %v749, 4
    %v751 = vadd.f32 %v749, %v750
    %v752 = vrot.slane %v751, 2
    %v753 = vadd.f32 %v751, %v752
    %v754 = vrot.slane %v753, 1
    %v755 = vadd.f32 %v753, %v754
    %v756 = vmul.f32 %v755, %v745
    %v757 = vadd.f32 %v756, 1e-05
    %v758 = vrsqrt.pop %v757
    %v759 = vmul.f32 %v758, %v757
    %v760 = vmul.f32 %v759, %v758
    %v761 = vmul.f32 0.5, %v760
    %v762 = vsub.f32 1.5, %v761
    %v763 = vmul.f32 %v758, %v762
    %vm764 = vweird.f32 %v757
    %vm765 = vweird.f32 %v758
    %vm766 = vmor %vm764, %vm765
    %v767 = vsel %vm766, %v758, %v763
    %v768 = vmul.f32 %v747, %v767
    %v770 = vperm.slane %v729, 0
    %v772 = vmul.f32 %v768, %v770
    %v774 = vperm.slane %v730, 0
    %v776 = vadd.f32 %v772, %v774
    %v777 = vld [vmem:[#allocation16] sm:$0xff]
    %v778 = vld [vmem:[#allocation16 + $0x8] sm:$0xff]
    %v779 = vld [vmem:[#allocation16 + $0x10] sm:$0xff]
    %v780 = vld [vmem:[#allocation16 + $0x18] sm:$0xff]
    %v781 = vld [vmem:[#allocation16 + $0x20] sm:$0xff]
    %v782 = vld [vmem:[#allocation16 + $0x28] sm:$0xff]
    %v783 = vld [vmem:[#allocation16 + $0x30] sm:$0xff]
    %v784 = vld [vmem:[#allocation16 + $0x38] sm:$0xff]
    %v785 = vld [vmem:[#allocation16 + $0x40] sm:$0xff]
    %v786 = vld [vmem:[#allocation16 + $0x48] sm:$0xff]
    %v787 = vld [vmem:[#allocation16 + $0x50] sm:$0xff]
    %v788 = vld [vmem:[#allocation16 + $0x58] sm:$0xff]
    %v789 = vld [vmem:[#allocation16 + $0x60] sm:$0xff]
    %v790 = vld [vmem:[#allocation16 + $0x68] sm:$0xff]
    %v791 = vld [vmem:[#allocation16 + $0x70] sm:$0xff]
    %v792 = vld [vmem:[#allocation16 + $0x78] sm:$0xff]
    %v793 = vld [vmem:[%s13] sm:$0x1]
    %v795 = vperm.slane %v793, 0
    %797 = vmatpush.msra.mxu0 %v792
    %798 = vmatpush.msra.mxu0 %v791
    %799 = vmatpush.msra.mxu0 %v790
    %800 = vmatpush.msra.mxu0 %v789
    %801 = vmatpush.msra.mxu0 %v788
    %802 = vmatpush.msra.mxu0 %v787
    %803 = vmatpush.msra.mxu0 %v786
    %804 = vmatpush.msra.mxu0 %v785
    %805 = vmatpush.msra.mxu0 %v784
    %806 = vmatpush.msra.mxu0 %v783
    %807 = vmatpush.msra.mxu0 %v782
    %808 = vmatpush.msra.mxu0 %v781
    %809 = vmatpush.msra.mxu0 %v780
    %810 = vmatpush.msra.mxu0 %v779
    %811 = vmatpush.msra.mxu0 %v778
    %812 = vmatpush.msra.mxu0 %v777
    %813 = vmatmul.f32.gmra.mxu0 %v776
    %v814 = vpop.f32.mrf.mxu0
    %v815 = vadd.f32 %v795, %v814
    %816 = vdwg.mxu0
    %v817 = vmax.f32 %v815, 0.0
    %v818 = vld [vmem:[%s14] sm:$0x1]
    %v819 = vld [vmem:[%s15] sm:$0x1]
    %v820 = vsel %vm731, %v817, 0.0
    %v821 = vrot.slane %v820, 4
    %v822 = vadd.f32 %v820, %v821
    %v823 = vrot.slane %v822, 2
    %v824 = vadd.f32 %v822, %v823
    %v825 = vrot.slane %v824, 1
    %v826 = vadd.f32 %v824, %v825
    %v827 = vmul.f32 %v826, %v745
    %v828 = vsub.f32 %v817, %v827
    %v829 = vmul.f32 %v828, %v828
    %v830 = vsel %vm731, %v829, 0.0
    %v831 = vrot.slane %v830, 4
    %v832 = vadd.f32 %v830, %v831
    %v833 = vrot.slane %v832, 2
    %v834 = vadd.f32 %v832, %v833
    %v835 = vrot.slane %v834, 1
    %v836 = vadd.f32 %v834, %v835
    %v837 = vmul.f32 %v836, %v745
    %v838 = vadd.f32 %v837, 1e-05
    %v839 = vrsqrt.pop %v838
    %v840 = vmul.f32 %v839, %v838
    %v841 = vmul.f32 %v840, %v839
    %v842 = vmul.f32 0.5, %v841
    %v843 = vsub.f32 1.5, %v842
    %v844 = vmul.f32 %v839, %v843
    %vm845 = vweird.f32 %v838
    %vm846 = vweird.f32 %v839
    %vm847 = vmor %vm845, %vm846
    %v848 = vsel %vm847, %v839, %v844
    %v849 = vmul.f32 %v828, %v848
    %v851 = vperm.slane %v818, 0
    %v853 = vmul.f32 %v849, %v851
    %v855 = vperm.slane %v819, 0
    %v857 = vadd.f32 %v853, %v855
    %858 = vst [vmem:[#allocation18] sm:$0x7] %v857
    // Predicated region
    $region102: #{tpu_custom_call.1} parent=1 // pred_check
      _
    $region103: #{tpu_custom_call.1} parent=1 // pred_check_branch
      %860 = sbr.rel (0) target = $region105
    $region104: #{tpu_custom_call.1} parent=1 // pred_region
      %862 = vsyncadd [#allocation4], 0
      %s863 = sshll.u32 [#allocation17], 4
      %s864 = int_to_ptr.vmem [resolvable:$true] %s863
      %s865 = sshll.u32 %s16, 4
      %s866 = int_to_ptr.hbm [resolvable:$true] %s865
      %871 = dma.vmem_to_hbm [thread:$0]  %s864, 384, %s866, [#allocation4], 128, 128, 8
    $region105: #{tpu_custom_call.1} parent=1 // pred_fallthru
      _
    // Predicated region
    $region106: #{tpu_custom_call.1} parent=1 // pred_check
      _
    $region107: #{tpu_custom_call.1} parent=1 // pred_check_branch
      %873 = sbr.rel (0) target = $region109
    $region108: #{tpu_custom_call.1} parent=1 // pred_region
      %875 = vsyncadd [#allocation19], 0
      %s877 = sshll.u32 [#allocation18], 4
      %s878 = int_to_ptr.vmem [resolvable:$true] %s877
      %s879 = sshll.u32 %s17, 4
      %s880 = int_to_ptr.hbm [resolvable:$true] %s879
      %882 = dma.vmem_to_hbm [thread:$0]  %s878, 64, %s880, [#allocation19]
    $region109: #{tpu_custom_call.1} parent=1 // pred_fallthru
      _
    // Predicated region
    $region110: #{tpu_custom_call.1} parent=1 // pred_check
      _
    $region111: #{tpu_custom_call.1} parent=1 // pred_check_branch
      %884 = sbr.rel (0) target = $region113
    $region112: #{tpu_custom_call.1} parent=1 // pred_region
      %886 = dma.done [#allocation4], 384
    $region113: #{tpu_custom_call.1} parent=1 // pred_fallthru
      _
    // Predicated region
    $region114: #{tpu_custom_call.1} parent=1 // pred_check
      _
    $region115: #{tpu_custom_call.1} parent=1 // pred_check_branch
      %888 = sbr.rel (0) target = $region117
    $region116: #{tpu_custom_call.1} parent=1 // pred_region
      %890 = dma.done [#allocation19], 64
    $region117: #{tpu_custom_call.1} parent=1 // pred_fallthru
      _
    %891 = vsyncpa [#allocation3], 1
    %892 = vsyncpa [#allocation6], 1
    %893 = vsyncpa [#allocation9], 1
    %894 = vsyncpa [#allocation12], 1
    %895 = vsyncpa [#allocation15], 1
    %896 = vsyncpa [#allocation4], 1
    %897 = vsyncpa [#allocation19], 1

</llo_original>
